<compile_context>
chip_gen: v5e
topology: v5e:2x2
jax: 0.10.0
libtpu: 0.0.40
codegen_flags: <defaults>
</compile_context>

<pallas_src>
import functools

import jax
import jax.numpy as jnp
from jax import lax
from jax.experimental import pallas as pl
from jax.experimental.pallas import tpu as pltpu


def _round_up(a, m):
    return ((a + m - 1) // m) * m


def _center_loss_kernel(x_ref, c_ref, csq_ref, lab_ref, out_ref, acc_ref,
                        *, batch_size, tile_rows, needs_row_mask):
    i = pl.program_id(0)

    @pl.when(i == 0)
    def _():
        acc_ref[...] = jnp.zeros_like(acc_ref)

    x = x_ref[...].astype(jnp.float32)       # (TB, D)
    c = c_ref[...].astype(jnp.float32)       # (C, D)  resident
    c_sq = csq_ref[...]                      # (1, C)  precomputed in wrapper
    labels = lab_ref[...]                    # (TB, 1) int32

    num_classes = c.shape[0]

    # ||x_b||^2 per row (VPU, lane reduce)
    x_sq = jnp.sum(x * x, axis=1, keepdims=True)                 # (TB, 1)

    # x @ centers^T on the MXU (contract over feat_dim), f32 accumulation
    xc = lax.dot_general(
        x, c,
        dimension_numbers=(((1,), (1,)), ((), ())),
        preferred_element_type=jnp.float32,
    )                                                             # (TB, C)

    distmat = x_sq + c_sq - 2.0 * xc                              # (TB, C)

    # mask[b, k] = (labels[b] == k)
    classes = lax.broadcasted_iota(jnp.int32, (tile_rows, num_classes), 1)
    mask = (labels == classes).astype(jnp.float32)

    # clamp AFTER masking: off-label entries contribute exactly 1e-12 each.
    vals = jnp.clip(distmat * mask, 1e-12, 1e12)

    if needs_row_mask:
        # Zero out padded rows entirely (neither distance nor 1e-12 floor).
        row = i * tile_rows + lax.broadcasted_iota(
            jnp.int32, (tile_rows, num_classes), 0)
        vals = jnp.where(row < batch_size, vals, 0.0)

    # lane reduce then sublane reduce, keep (1, 1) shape for the VMEM scratch
    partial = jnp.sum(jnp.sum(vals, axis=1, keepdims=True), axis=0,
                      keepdims=True)                              # (1, 1)
    acc_ref[...] += partial

    # Fold the final scale as a multiply by the compile-time constant 1/B.
    out_ref[...] = acc_ref[...] * jnp.float32(1.0 / batch_size)


def center_loss(x, centers, labels):
    """x: (B, D) float, centers: (C, D) float, labels: (B,) int. Returns scalar."""
    B, D = x.shape
    C, _ = centers.shape

    # Batch tile: multiple of 8 sublanes, capped so the fp32 (TB, D) tile stays
    # ~<=2 MiB per buffer (double-buffered inputs fit every generation's
    # scoped-VMEM default without raising vmem_limit_bytes).
    TB = min(256, _round_up(B, 8))
    max_tb = max(8, (((2 * 1024 * 1024) // (4 * D)) // 8) * 8)
    TB = max(8, min(TB, max_tb))

    B_pad = _round_up(B, TB)
    num_tiles = B_pad // TB

    x_f32 = x.astype(jnp.float32)
    labels2d = labels.astype(jnp.int32).reshape(B, 1)
    if B_pad != B:
        x_f32 = jnp.pad(x_f32, ((0, B_pad - B), (0, 0)))
        labels2d = jnp.pad(labels2d, ((0, B_pad - B), (0, 0)))

    centers_f32 = centers.astype(jnp.float32)
    # Hoisted, batch-independent ||centers||^2 as a lane-major (1, C) row.
    c_sq = jnp.sum(centers_f32 * centers_f32, axis=1)[None, :]

    kernel = functools.partial(
        _center_loss_kernel,
        batch_size=B,
        tile_rows=TB,
        needs_row_mask=(B_pad != B),
    )

    out = pl.pallas_call(
        kernel,
        out_shape=jax.ShapeDtypeStruct((1, 1), jnp.float32),
        grid_spec=pltpu.PrefetchScalarGridSpec(
            num_scalar_prefetch=0,
            grid=(num_tiles,),
            in_specs=[
                pl.BlockSpec((TB, D), lambda i: (i, 0)),   # x tile (pipelined)
                pl.BlockSpec((C, D), lambda i: (0, 0)),    # centers (resident)
                pl.BlockSpec((1, C), lambda i: (0, 0)),    # ||centers||^2 row
                pl.BlockSpec((TB, 1), lambda i: (i, 0)),   # labels tile
            ],
            out_specs=pl.BlockSpec((1, 1), lambda i: (0, 0)),
            scratch_shapes=[pltpu.VMEM((1, 1), jnp.float32)],
        ),
        compiler_params=pltpu.CompilerParams(
            dimension_semantics=("arbitrary",)),   # batch axis is a reduction
    )(x_f32, centers_f32, c_sq, labels2d)
    return out[0, 0]


def center_loss_ref(x, centers, labels):
    """Pure-JAX reference mirroring the PyTorch forward."""
    B = x.shape[0]
    C = centers.shape[0]
    distmat = (
        jnp.sum(x ** 2, axis=1, keepdims=True)
        + jnp.sum(centers ** 2, axis=1, keepdims=True).T
        - 2.0 * x @ centers.T
    )
    mask = (labels[:, None] == jnp.arange(C)[None, :]).astype(jnp.float32)
    dist = jnp.clip(distmat * mask, 1e-12, 1e12)
    return jnp.sum(dist) / B


if __name__ == "__main__":
    # Module defaults: num_classes=10; pick feat_dim=32, batch=8 (small).
    num_classes = 10
    feat_dim = 32
    batch = 8

    key = jax.random.PRNGKey(0)
    k_centers, k_x, k_lab = jax.random.split(key, 3)

    # nn.Parameter(torch.randn(num_classes, feat_dim)) -> deterministic normal init
    centers = jax.random.normal(k_centers, (num_classes, feat_dim), dtype=jnp.float32)
    x = jax.random.normal(k_x, (batch, feat_dim), dtype=jnp.float32)
    labels = jax.random.randint(k_lab, (batch,), 0, num_classes, dtype=jnp.int32)

    loss = jax.block_until_ready(center_loss(x, centers, labels))
    ref = jax.block_until_ready(center_loss_ref(x, centers, labels))
    assert jnp.allclose(loss, ref, rtol=1e-5, atol=1e-5), (loss, ref)

    # Exercise the padded-last-tile path (B not a multiple of the tile).
    batch2 = 13
    x2 = jax.random.normal(jax.random.PRNGKey(1), (batch2, feat_dim), dtype=jnp.float32)
    labels2 = jax.random.randint(jax.random.PRNGKey(2), (batch2,), 0, num_classes,
                                 dtype=jnp.int32)
    loss2 = jax.block_until_ready(center_loss(x2, centers, labels2))
    ref2 = jax.block_until_ready(center_loss_ref(x2, centers, labels2))
    assert jnp.allclose(loss2, ref2, rtol=1e-5, atol=1e-5), (loss2, ref2)

    print("KERNEL_OK")
</pallas_src>

<mosaic_0001>
module attributes {stable_mosaic.version = 11 : i64} {
  func.func @_center_loss_kernel(%arg0: i32, %arg1: memref<8x32xf32, #tpu.memory_space<vmem>>, %arg2: memref<10x32xf32, #tpu.memory_space<vmem>>, %arg3: memref<1x10xf32, #tpu.memory_space<vmem>>, %arg4: memref<8x1xi32, #tpu.memory_space<vmem>>, %arg5: memref<1x1xf32, #tpu.memory_space<vmem>>, %arg6: memref<1x1xf32, #tpu.memory_space<vmem>>) attributes {dimension_semantics = [#tpu.dimension_semantics<arbitrary>], iteration_bounds = array<i64: 1>, scalar_prefetch = 0 : i64, scratch_operands = 1 : i64, tpu.core_type = #tpu.core_type<tc>, window_params = [{transform_indices = @transform_0, window_bounds = array<i64: 8, 32>}, {pipeline_mode = #tpu.pipeline_mode<synchronous>, transform_indices = @transform_1, window_bounds = array<i64: 10, 32>}, {pipeline_mode = #tpu.pipeline_mode<synchronous>, transform_indices = @transform_2, window_bounds = array<i64: 1, 10>}, {transform_indices = @transform_3, window_bounds = array<i64: 8, 1>}, {pipeline_mode = #tpu.pipeline_mode<synchronous>, transform_indices = @transform_4, window_bounds = array<i64: 1, 1>}]} {
    %c0_i32 = arith.constant 0 : i32
    %0 = arith.cmpi eq, %arg0, %c0_i32 : i32
    %1 = arith.extui %0 : i1 to i32
    %c0_i32_0 = arith.constant 0 : i32
    %2 = arith.cmpi ne, %1, %c0_i32_0 : i32
    scf.if %2 {
      %cst_23 = arith.constant 0.000000e+00 : f32
      %38 = vector.broadcast %cst_23 : f32 to vector<1x1xf32>
      %c0_24 = arith.constant 0 : index
      %c0_25 = arith.constant 0 : index
      %39 = vector.load %arg6[%c0_24, %c0_25] : memref<1x1xf32, #tpu.memory_space<vmem>>, vector<1x1xf32>
      tpu.vector_store %arg6[%c0_24, %c0_25], %38 {strides = array<i32>} : memref<1x1xf32, #tpu.memory_space<vmem>>, vector<1x1xf32>,
    } else {
    }
    %c0 = arith.constant 0 : index
    %c0_1 = arith.constant 0 : index
    %3 = vector.load %arg1[%c0, %c0_1] : memref<8x32xf32, #tpu.memory_space<vmem>>, vector<8x32xf32>
    %c0_2 = arith.constant 0 : index
    %c0_3 = arith.constant 0 : index
    %4 = vector.load %arg2[%c0_2, %c0_3] : memref<10x32xf32, #tpu.memory_space<vmem>>, vector<10x32xf32>
    %c0_4 = arith.constant 0 : index
    %c0_5 = arith.constant 0 : index
    %5 = vector.load %arg3[%c0_4, %c0_5] : memref<1x10xf32, #tpu.memory_space<vmem>>, vector<1x10xf32>
    %c0_6 = arith.constant 0 : index
    %c0_7 = arith.constant 0 : index
    %6 = vector.load %arg4[%c0_6, %c0_7] : memref<8x1xi32, #tpu.memory_space<vmem>>, vector<8x1xi32>
    %7 = arith.mulf %3, %3 : vector<8x32xf32>
    %cst = arith.constant dense<0.000000e+00> : vector<8xf32>
    %8 = vector.multi_reduction <add>, %7, %cst [1] : vector<8x32xf32> to vector<8xf32>
    %9 = vector.shape_cast %8 : vector<8xf32> to vector<8x1xf32>
    %cst_8 = arith.constant dense<0.000000e+00> : vector<8x10xf32>
    %10 = tpu.matmul %3, %4, %cst_8 {dimension_numbers = #tpu.dot_dimension_numbers<[1], [1], [0], [0], [0, 0, 1, 0], [], []>} : vector<8x32xf32>, vector<10x32xf32>, vector<8x10xf32> -> vector<8x10xf32>
    %11 = vector.broadcast %9 : vector<8x1xf32> to vector<8x10xf32>
    %12 = vector.broadcast %5 : vector<1x10xf32> to vector<8x10xf32>
    %13 = arith.addf %11, %12 : vector<8x10xf32>
    %cst_9 = arith.constant 2.000000e+00 : f32
    %14 = vector.broadcast %cst_9 : f32 to vector<8x10xf32>
    %15 = arith.mulf %14, %10 : vector<8x10xf32>
    %16 = arith.subf %13, %15 : vector<8x10xf32>
    %17 = tpu.iota {dimensions = array<i32: 1>} : vector<8x10xi32>
    %18 = vector.broadcast %6 : vector<8x1xi32> to vector<8x10xi32>
    %19 = arith.cmpi eq, %18, %17 : vector<8x10xi32>
    %20 = arith.extui %19 : vector<8x10xi1> to vector<8x10xi32>
    %21 = arith.sitofp %20 : vector<8x10xi32> to vector<8x10xf32>
    %22 = arith.mulf %16, %21 : vector<8x10xf32>
    %cst_10 = arith.constant 9.99999996E-13 : f32
    %cst_11 = arith.constant 9.99999995E+11 : f32
    %23 = vector.broadcast %cst_10 : f32 to vector<8x10xf32>
    %24 = arith.maximumf %23, %22 : vector<8x10xf32>
    %25 = vector.broadcast %cst_11 : f32 to vector<8x10xf32>
    %26 = arith.minimumf %25, %24 : vector<8x10xf32>
    %cst_12 = arith.constant dense<0.000000e+00> : vector<8xf32>
    %27 = vector.multi_reduction <add>, %26, %cst_12 [1] : vector<8x10xf32> to vector<8xf32>
    %28 = vector.shape_cast %27 : vector<8xf32> to vector<8x1xf32>
    %cst_13 = arith.constant dense<0.000000e+00> : vector<1xf32>
    %29 = vector.multi_reduction <add>, %28, %cst_13 [0] : vector<8x1xf32> to vector<1xf32>
    %30 = vector.shape_cast %29 : vector<1xf32> to vector<1x1xf32>
    %c0_14 = arith.constant 0 : index
    %c0_15 = arith.constant 0 : index
    %31 = vector.load %arg6[%c0_14, %c0_15] : memref<1x1xf32, #tpu.memory_space<vmem>>, vector<1x1xf32>
    %32 = arith.addf %31, %30 : vector<1x1xf32>
    %c0_16 = arith.constant 0 : index
    %c0_17 = arith.constant 0 : index
    %33 = vector.load %arg6[%c0_16, %c0_17] : memref<1x1xf32, #tpu.memory_space<vmem>>, vector<1x1xf32>
    tpu.vector_store %arg6[%c0_16, %c0_17], %32 {strides = array<i32>} : memref<1x1xf32, #tpu.memory_space<vmem>>, vector<1x1xf32>,
    %c0_18 = arith.constant 0 : index
    %c0_19 = arith.constant 0 : index
    %34 = vector.load %arg6[%c0_18, %c0_19] : memref<1x1xf32, #tpu.memory_space<vmem>>, vector<1x1xf32>
    %cst_20 = arith.constant 1.250000e-01 : f32
    %35 = vector.broadcast %cst_20 : f32 to vector<1x1xf32>
    %36 = arith.mulf %34, %35 : vector<1x1xf32>
    %c0_21 = arith.constant 0 : index
    %c0_22 = arith.constant 0 : index
    %37 = vector.load %arg5[%c0_21, %c0_22] : memref<1x1xf32, #tpu.memory_space<vmem>>, vector<1x1xf32>
    tpu.vector_store %arg5[%c0_21, %c0_22], %36 {strides = array<i32>} : memref<1x1xf32, #tpu.memory_space<vmem>>, vector<1x1xf32>,
    return
  }
  func.func @transform_0(%arg0: i32) -> (i32, i32) {
    %c0_i32 = arith.constant 0 : i32
    %c0_i32_0 = arith.constant 0 : i32
    return %arg0, %c0_i32 : i32, i32
  }
  func.func @transform_1(%arg0: i32) -> (i32, i32) {
    %c0_i32 = arith.constant 0 : i32
    %c0_i32_0 = arith.constant 0 : i32
    %c0_i32_1 = arith.constant 0 : i32
    return %c0_i32, %c0_i32_0 : i32, i32
  }
  func.func @transform_2(%arg0: i32) -> (i32, i32) {
    %c0_i32 = arith.constant 0 : i32
    %c0_i32_0 = arith.constant 0 : i32
    %c0_i32_1 = arith.constant 0 : i32
    return %c0_i32, %c0_i32_0 : i32, i32
  }
  func.func @transform_3(%arg0: i32) -> (i32, i32) {
    %c0_i32 = arith.constant 0 : i32
    %c0_i32_0 = arith.constant 0 : i32
    return %arg0, %c0_i32 : i32, i32
  }
  func.func @transform_4(%arg0: i32) -> (i32, i32) {
    %c0_i32 = arith.constant 0 : i32
    %c0_i32_0 = arith.constant 0 : i32
    %c0_i32_1 = arith.constant 0 : i32
    return %c0_i32, %c0_i32_0 : i32, i32
  }
}

</mosaic_0001>

<llo_original>
// kernel: tpu_custom_call.1
$region0: #{tpu_custom_call.1}
  #allocation0 [shape = 'u32[]', space=smem, size = 0x4, offset = 0x4, fixed_abs, tag = 'smem constant byte address 0x4 - core index']
  #allocation1 [shape = 'u32[72,128]{1,0:T(1,128)}', space=vmem, size = 0x9000, scoped, tag = 'internal scratch']
  #allocation2 [shape = 'f32[1,1]{1,0:T(1,128)}', space=vmem, size = 0x200, scoped, tag = 'scratch operand']
  %s0 = inlined_call_operand.vmem [shape: f32[8,32], index: 0, kind: input, shape index: {}]
  %s1 = inlined_call_operand.hbm [shape: f32[10,32], index: 1, kind: input, shape index: {}]
  %s2 = inlined_call_operand.vmem [shape: f32[1,10], index: 2, kind: input, shape index: {}]
  %s3 = inlined_call_operand.vmem [shape: s32[8,1], index: 3, kind: input, shape index: {}]
  %s4 = inlined_call_operand.hbm [shape: f32[1,1], index: 4, kind: output, shape index: {}]
  %s5 = sld [smem:[#allocation0]]
  $region34: #{tpu_custom_call.1} parent=0
    _
  %s7 = ssub.s32 1, %s5
  %s8 = scalar_select 0, %s7, %s5
  $region1: #{tpu_custom_call.1} parent=0
    #allocation3 [shape = 'u8[8192]{0}', space=vmem, size = 0x2000, scoped, tag = 'input window, operand 1, single buffered']
    #allocation4 [shape = 's32[1]{0}', space=sflag, size = 0x4, scoped, tag = 'scoped memory for tpu_custom_call.1']
    #allocation5 [shape = 's32[1]{0}', space=sflag, size = 0x4, scoped, tag = 'scoped memory for tpu_custom_call.1']
    #allocation6 [shape = 'u8[512]{0}', space=vmem, size = 0x400, scoped, tag = 'output window, operand 0, single buffered']
    %9 = vsyncpa [#allocation4], 0
    %10 = vsyncpa [#allocation5], 0
    // Predicated region
    $region2: #{tpu_custom_call.1} parent=1 // pred_check
      _
    $region3: #{tpu_custom_call.1} parent=1 // pred_check_branch
      %12 = sbr.rel (0) target = $region5
    $region4: #{tpu_custom_call.1} parent=1 // pred_region
      _
    $region5: #{tpu_custom_call.1} parent=1 // pred_fallthru
      _
    // Predicated region
    $region6: #{tpu_custom_call.1} parent=1 // pred_check
      _
    $region7: #{tpu_custom_call.1} parent=1 // pred_check_branch
      %14 = sbr.rel (0) target = $region9
    $region8: #{tpu_custom_call.1} parent=1 // pred_region
      %16 = vsyncadd [#allocation4], 0
      %s17 = sshll.u32 %s1, 4
      %s18 = int_to_ptr.hbm [resolvable:$true] %s17
      %s19 = sshll.u32 [#allocation3], 4
      %s20 = int_to_ptr.vmem [resolvable:$true] %s19
      %25 = dma.hbm_to_vmem [thread:$0]  %s18, 256, %s20, [#allocation4], 128, 128, 8
    $region9: #{tpu_custom_call.1} parent=1 // pred_fallthru
      _
    // Predicated region
    $region10: #{tpu_custom_call.1} parent=1 // pred_check
      _
    $region11: #{tpu_custom_call.1} parent=1 // pred_check_branch
      %27 = sbr.rel (0) target = $region13
    $region12: #{tpu_custom_call.1} parent=1 // pred_region
      _
    $region13: #{tpu_custom_call.1} parent=1 // pred_fallthru
      _
    // Predicated region
    $region14: #{tpu_custom_call.1} parent=1 // pred_check
      _
    $region15: #{tpu_custom_call.1} parent=1 // pred_check_branch
      %29 = sbr.rel (0) target = $region17
    $region16: #{tpu_custom_call.1} parent=1 // pred_region
      _
    $region17: #{tpu_custom_call.1} parent=1 // pred_fallthru
      _
    // Predicated region
    $region18: #{tpu_custom_call.1} parent=1 // pred_check
      _
    $region19: #{tpu_custom_call.1} parent=1 // pred_check_branch
      %31 = sbr.rel (0) target = $region21
    $region20: #{tpu_custom_call.1} parent=1 // pred_region
      %33 = dma.done [#allocation4], 256
    $region21: #{tpu_custom_call.1} parent=1 // pred_fallthru
      _
    %p34 = scmp.eq.s32.totalorder 0, 0
    // Predicated region
    $region22: #{tpu_custom_call.1} parent=1 // pred_check
      %p35 = pneg %p34
    $region23: #{tpu_custom_call.1} parent=1 // pred_check_branch
      %37 = sbr.rel (%p35) target = $region25
    $region24: #{tpu_custom_call.1} parent=1 // pred_region
      %vm38 = vcmask 0
      %39 = vst.msk [vmem:[#allocation2] sm:$0x1] %vm38, 0.0
    $region25: #{tpu_custom_call.1} parent=1 // pred_fallthru
      _
    %v40 = vld [vmem:[%s0] sm:$0xff]
    %v41 = vld [vmem:[#allocation3] sm:$0xff]
    %v42 = vld [vmem:[#allocation3 + $0x8] sm:$0x3]
    %v43 = vld [vmem:[%s2] sm:$0x1]
    %v44 = vld [vmem:[%s3] sm:$0xff]
    %v45 = vmul.f32 %v40, %v40
    %vm46 = vcmask 261120
    %v47 = vsel %vm46, %v45, 0.0
    %48 = vadd.xlane.f32.xlu0 %v47
    %v49 = vpop.xlane.xlu0 %48
    %v51 = vsel %vm46, %v40, 0
    %v54 = vsel %vm46, %v41, 0
    %v57 = vsel %vm46, %v42, 0
    %59 = vmatpush.xpose.msra.mxu0 0.0
    %60 = vmatpush.xpose.msra.mxu0 0.0
    %61 = vmatpush.xpose.msra.mxu0 0.0
    %62 = vmatpush.xpose.msra.mxu0 0.0
    %63 = vmatpush.xpose.msra.mxu0 0.0
    %64 = vmatpush.xpose.msra.mxu0 0.0
    %65 = vmatpush.xpose.msra.mxu0 0.0
    %66 = vmatpush.xpose.msra.mxu0 0.0
    %67 = vmatpush.xpose.msra.mxu0 0.0
    %68 = vmatpush.xpose.msra.mxu0 0.0
    %69 = vmatpush.xpose.msra.mxu0 0.0
    %70 = vmatpush.xpose.msra.mxu0 0.0
    %71 = vmatpush.xpose.msra.mxu0 0.0
    %72 = vmatpush.xpose.msra.mxu0 0.0
    %73 = vmatpush.xpose.msra.mxu0 %v57
    %74 = vmatpush.xpose.msra.mxu0 %v54
    %75 = vmatmul.f32.gmra.mxu0 %v51
    %v76 = vpop.f32.mrf.mxu0
    %v77 = vadd.f32 0.0, %v76
    %78 = vdwg.mxu0
    %v80 = vperm.slane %v43, 0
    %v82 = vadd.f32 %v49, %v80
    %v83 = vmul.f32 %v77, 2.0
    %v84 = vsub.f32 %v82, %v83
    %v85 = vlaneseq
    %v86 = vand.u32 %v85, 127
    %87 = vset.pattern.permute.xlu0 0
    %88 = vperm.xlu0 %87, %v44
    %v89 = vpop.permute.xlu0 %88
    %vm90 = vcmp.eq.s32.totalorder %v89, %v86
    %v91 = vsel %vm90, 1, 0
    %v92 = vcvt.s32.f32 %v91
    %v93 = vmul.f32 %v84, %v92
    %v94 = vmax.f32 %v93, 1e-12
    %v95 = vmin.f32 %v94, 1e+12
    %vm96 = vcmask 80896
    %v97 = vsel %vm96, %v95, 0.0
    %98 = vadd.xlane.f32.xlu0 %v97
    %v99 = vpop.xlane.xlu0 %98
    %v100 = vrot.slane %v99, 4
    %v101 = vadd.f32 %v99, %v100
    %v102 = vrot.slane %v101, 2
    %v103 = vadd.f32 %v101, %v102
    %v104 = vrot.slane %v103, 1
    %v105 = vadd.f32 %v103, %v104
    %v106 = vld [vmem:[#allocation2] sm:$0x1]
    %v107 = vadd.f32 %v106, %v105
    %vm108 = vcmask 0
    %109 = vst.msk [vmem:[#allocation2] sm:$0x1] %vm108, %v107
    %v110 = vld [vmem:[#allocation2] sm:$0x1]
    %v111 = vmul.f32 %v110, 0.125
    %112 = vst.msk [vmem:[#allocation6] sm:$0x1] %vm108, %v111
    // Predicated region
    $region26: #{tpu_custom_call.1} parent=1 // pred_check
      _
    $region27: #{tpu_custom_call.1} parent=1 // pred_check_branch
      %114 = sbr.rel (0) target = $region29
    $region28: #{tpu_custom_call.1} parent=1 // pred_region
      %116 = vsyncadd [#allocation5], 0
      %s118 = sshll.u32 [#allocation6], 4
      %s119 = int_to_ptr.vmem [resolvable:$true] %s118
      %s120 = sshll.u32 %s4, 4
      %s121 = int_to_ptr.hbm [resolvable:$true] %s120
      %123 = dma.vmem_to_hbm [thread:$0]  %s119, 16, %s121, [#allocation5]
    $region29: #{tpu_custom_call.1} parent=1 // pred_fallthru
      _
    // Predicated region
    $region30: #{tpu_custom_call.1} parent=1 // pred_check
      _
    $region31: #{tpu_custom_call.1} parent=1 // pred_check_branch
      %125 = sbr.rel (0) target = $region33
    $region32: #{tpu_custom_call.1} parent=1 // pred_region
      %127 = dma.done [#allocation5], 16
    $region33: #{tpu_custom_call.1} parent=1 // pred_fallthru
      _
    %128 = vsyncpa [#allocation4], 1
    %129 = vsyncpa [#allocation5], 1

</llo_original>
